<compile_context>
chip_gen: v7x
topology: tpu7x:2x2x1
jax: 0.10.0
libtpu: 0.0.40
codegen_flags: <defaults>
</compile_context>

<pallas_src>
import jax
import jax.numpy as jnp
from jax import lax
from jax.experimental import pallas as pl
from jax.experimental.pallas import tpu as pltpu

LANE = 128
SUBLANE = 8
VMEM_LIMIT = 32 * 1024 * 1024   # explicit, fits v5e/v6e/v7x scoped budgets


def _round_up(x, m):
    return ((x + m - 1) // m) * m


def _choose_tile(n_pad):
    """Largest N-tile in {32,16,8} dividing n_pad that still yields >=2 grid steps."""
    for c in (32, 16, 8):
        if n_pad % c == 0 and n_pad // c >= 2:
            return c
    return n_pad


# ----------------------------------------------------------------------------
# Stage 1: tiled mean pooling (grid over sentence rows, parallel axis).
# ----------------------------------------------------------------------------
def _pooling_kernel(emb_ref, mask_ref, out_ref):
    emb = emb_ref[...].astype(jnp.float32)              # (TN, T, D)  bf16 -> f32
    m = mask_ref[...]                                   # (TN, T)     f32
    num = jnp.sum(emb * m[:, :, None], axis=1)          # (TN, D)
    den = jnp.maximum(jnp.sum(m, axis=1, keepdims=True), 1e-9)   # (TN, 1)
    # divide -> EUP reciprocal (approx) instead of VPU divide
    out_ref[...] = num * pl.reciprocal(den, approx=True)


# ----------------------------------------------------------------------------
# Stage 2: LSTM stack + linear head, single invocation, activations in VMEM.
# ----------------------------------------------------------------------------
def _make_lstm_head_kernel(n_layers, B_pad, S, H_pad):
    fourH = 4 * H_pad

    def kernel(*refs):
        sent_ref = refs[0]
        pos = 1
        layer_refs = []
        for _ in range(n_layers):
            layer_refs.append((refs[pos], refs[pos + 1], refs[pos + 2]))
            pos += 3
        wout_ref, bout_ref = refs[pos], refs[pos + 1]
        out_ref = refs[pos + 2]
        gx_sc, y_sc = refs[pos + 3], refs[pos + 4]

        # Rows of sent are already time-major (row = s*B_pad + b).
        x = sent_ref[...]                                # (S*B_pad, Din)
        h_last = None
        for layer_idx, (wih_ref, whh_ref, b_ref) in enumerate(layer_refs):
            whh = whh_ref[...]                           # (H_pad, 4H_pad), loaded once
            # Hoisted input projection: one batched matmul per layer.
            gx = (jnp.dot(x, wih_ref[...],
                          preferred_element_type=jnp.float32)
                  + b_ref[...])                          # (S*B_pad, 4H_pad)
            gx_sc[...] = gx.reshape(S, B_pad, fourH)     # tile-aligned reshape
            is_last = layer_idx == n_layers - 1

            def step(t, carry, whh=whh, store_y=not is_last):
                h, c = carry
                g = gx_sc[t] + jnp.dot(h, whh,
                                       preferred_element_type=jnp.float32)
                # PyTorch nn.LSTM gate order: i, f, g, o  (each 128-lane aligned)
                i_g = jax.nn.sigmoid(g[:, 0:H_pad])
                f_g = jax.nn.sigmoid(g[:, H_pad:2 * H_pad])
                g_g = jnp.tanh(g[:, 2 * H_pad:3 * H_pad])
                o_g = jax.nn.sigmoid(g[:, 3 * H_pad:4 * H_pad])
                c_n = f_g * c + i_g * g_g
                h_n = o_g * jnp.tanh(c_n)
                if store_y:                              # skipped on last layer
                    y_sc[t, :, :] = h_n                  # lane-dense (B_pad,128) store
                return (h_n, c_n)

            zeros = jnp.zeros((B_pad, H_pad), jnp.float32)
            h_last, _ = lax.fori_loop(0, S, step, (zeros, zeros),
                                      unroll=True if S <= 16 else 2)
            if not is_last:
                x = y_sc[...].reshape(S * B_pad, H_pad)  # next layer input (time-major)

        # Linear head on last-timestep hidden (dropout = identity at inference).
        logits = (jnp.dot(h_last, wout_ref[...],
                          preferred_element_type=jnp.float32)
                  + bout_ref[...])                       # (B_pad, C_pad), lane-dense
        out_ref[...] = logits.astype(out_ref.dtype)

    return kernel


# ----------------------------------------------------------------------------
# Wrapper: Classifier.forward (inference) as two pallas_calls.
# ----------------------------------------------------------------------------
def classifier_forward(token_embeddings, mask, params):
    """token_embeddings: (B*S, T, D) — synthetic s_bert last_hidden_state.
       mask:             (B, S, T) attention mask."""
    B, S, T = mask.shape
    N, T2, D = token_embeddings.shape
    assert N == B * S and T2 == T
    H_pad = params["H_pad"]
    n_layers = len(params["lstm"])
    C_pad = params["w_out_t"].shape[1]

    # ---- wrapper-side layout plumbing (free relative to the kernels) -------
    # Pad batch to 8 sublanes and reorder rows to time-major (row = s*B_pad+b)
    # so layer-0 gate projections are already (S, B_pad, 4H) — no in-kernel
    # scatter.  Embeddings go to bf16 to halve the dominant HBM read.
    B_pad = _round_up(B, SUBLANE)
    emb4 = token_embeddings.reshape(B, S, T, D)
    emb4 = jnp.pad(emb4, ((0, B_pad - B), (0, 0), (0, 0), (0, 0)))
    emb_tm = jnp.transpose(emb4, (1, 0, 2, 3)).reshape(S * B_pad, T, D)
    emb_tm = emb_tm.astype(jnp.bfloat16)
    mask4 = jnp.pad(mask.reshape(B, S, T).astype(jnp.float32),
                    ((0, B_pad - B), (0, 0), (0, 0)))
    mask_tm = jnp.transpose(mask4, (1, 0, 2)).reshape(S * B_pad, T)

    N_pad = S * B_pad
    TN = _choose_tile(N_pad)
    n_tiles = N_pad // TN

    # ---- stage 1: tiled, pipelined mean pooling ----------------------------
    pooled = pl.pallas_call(
        _pooling_kernel,
        out_shape=jax.ShapeDtypeStruct((N_pad, D), jnp.float32),
        grid_spec=pltpu.PrefetchScalarGridSpec(
            num_scalar_prefetch=0,
            grid=(n_tiles,),
            in_specs=[pl.BlockSpec((TN, T, D), lambda i: (i, 0, 0)),
                      pl.BlockSpec((TN, T), lambda i: (i, 0))],
            out_specs=pl.BlockSpec((TN, D), lambda i: (i, 0)),
        ),
        compiler_params=pltpu.CompilerParams(
            dimension_semantics=("parallel",),        # shards over v7x's 2 TCs
            vmem_limit_bytes=VMEM_LIMIT),
        cost_estimate=pl.CostEstimate(
            flops=int(2 * N_pad * T * D),
            transcendentals=0,
            bytes_accessed=int(N_pad * T * D * 2 + N_pad * T * 4 + N_pad * D * 4)),
    )(emb_tm, mask_tm)

    # ---- stage 2: LSTM stack + head (small, single grid step) --------------
    lstm_inputs = [pooled]
    for lyr in params["lstm"]:
        lstm_inputs += [lyr["w_ih_t"], lyr["w_hh_t"], lyr["b"]]
    lstm_inputs += [params["w_out_t"], params["b_out"]]

    def full_spec(arr):
        nd = arr.ndim
        return pl.BlockSpec(arr.shape, lambda i, nd=nd: (0,) * nd)

    lstm_flops = 2 * B_pad * H_pad * C_pad
    for lyr in params["lstm"]:
        din_pad = lyr["w_ih_t"].shape[0]
        lstm_flops += (2 * N_pad * din_pad * 4 * H_pad          # input proj
                       + S * 2 * B_pad * H_pad * 4 * H_pad      # recurrence
                       + 10 * S * B_pad * H_pad)                # elementwise
    lstm_bytes = (sum(int(a.size) * a.dtype.itemsize for a in lstm_inputs)
                  + B_pad * C_pad * 4)

    kernel = _make_lstm_head_kernel(n_layers, B_pad, S, H_pad)
    logits_pad = pl.pallas_call(
        kernel,
        out_shape=jax.ShapeDtypeStruct((B_pad, C_pad), jnp.float32),
        grid_spec=pltpu.PrefetchScalarGridSpec(
            num_scalar_prefetch=0,
            grid=(1,),
            in_specs=[full_spec(a) for a in lstm_inputs],
            out_specs=pl.BlockSpec((B_pad, C_pad), lambda i: (0, 0)),
            scratch_shapes=[pltpu.VMEM((S, B_pad, 4 * H_pad), jnp.float32),  # gate proj
                            pltpu.VMEM((S, B_pad, H_pad), jnp.float32)],     # layer out
        ),
        compiler_params=pltpu.CompilerParams(
            dimension_semantics=("arbitrary",),
            vmem_limit_bytes=VMEM_LIMIT),
        cost_estimate=pl.CostEstimate(
            flops=int(lstm_flops),
            transcendentals=int(n_layers * S * B_pad * H_pad * 5),
            bytes_accessed=int(lstm_bytes)),
    )(*lstm_inputs)

    return logits_pad[:B, :params["n_classes"]]


# ----------------------------------------------------------------------------
# Parameters: raw PyTorch layout + prepared (pre-transposed / gate-padded).
# ----------------------------------------------------------------------------
def init_params_raw(key, n_layers, hidden_dim, embed_dim, n_classes):
    raw = {"lstm": []}
    for l in range(n_layers):
        din = embed_dim if l == 0 else hidden_dim
        key, k1, k2, k3, k4 = jax.random.split(key, 5)
        raw["lstm"].append({
            "w_ih": 0.1 * jax.random.normal(k1, (4 * hidden_dim, din), jnp.float32),
            "w_hh": 0.1 * jax.random.normal(k2, (4 * hidden_dim, hidden_dim), jnp.float32),
            "b_ih": 0.1 * jax.random.normal(k3, (4 * hidden_dim,), jnp.float32),
            "b_hh": 0.1 * jax.random.normal(k4, (4 * hidden_dim,), jnp.float32),
        })
    key, k5, k6 = jax.random.split(key, 3)
    raw["w_out"] = 0.1 * jax.random.normal(k5, (n_classes, hidden_dim), jnp.float32)
    raw["b_out"] = 0.1 * jax.random.normal(k6, (n_classes,), jnp.float32)
    return raw


def prepare_params(raw, n_classes, lane=LANE):
    """Pre-transpose weights and zero-pad each LSTM gate block (and the head)
    to 128-lane boundaries so all in-kernel gate slices are vreg-aligned.
    Padded lanes of h/c provably stay zero through the recurrence."""
    H = raw["lstm"][0]["w_hh"].shape[1]
    H_pad = _round_up(H, lane)
    params = {"lstm": [], "n_classes": n_classes, "H_pad": H_pad}
    for l, lyr in enumerate(raw["lstm"]):
        w_ih, w_hh = lyr["w_ih"], lyr["w_hh"]            # (4H, Din), (4H, H)
        Din = w_ih.shape[1]
        Din_pad = Din if l == 0 else H_pad               # layer>0 input is padded h
        wih_t = jnp.transpose(w_ih).reshape(Din, 4, H)
        wih_t = jnp.pad(wih_t, ((0, Din_pad - Din), (0, 0), (0, H_pad - H)))
        whh_t = jnp.transpose(w_hh).reshape(H, 4, H)
        whh_t = jnp.pad(whh_t, ((0, H_pad - H), (0, 0), (0, H_pad - H)))
        b = (lyr["b_ih"] + lyr["b_hh"]).reshape(4, H)
        b = jnp.pad(b, ((0, 0), (0, H_pad - H)))
        params["lstm"].append({
            "w_ih_t": wih_t.reshape(Din_pad, 4 * H_pad),
            "w_hh_t": whh_t.reshape(H_pad, 4 * H_pad),
            "b": b.reshape(1, 4 * H_pad),
        })
    C_pad = _round_up(n_classes, lane)                   # lane-dense head output
    params["w_out_t"] = jnp.pad(jnp.transpose(raw["w_out"]),
                                ((0, H_pad - H), (0, C_pad - n_classes)))
    params["b_out"] = jnp.pad(raw["b_out"].reshape(1, -1),
                              ((0, 0), (0, C_pad - n_classes)))
    return params


# ----------------------------------------------------------------------------
# Pure-JAX reference (PyTorch semantics) for correctness checking.
# ----------------------------------------------------------------------------
def reference_forward(token_embeddings, mask, raw, B, S):
    hp = lax.Precision.HIGHEST
    T = mask.shape[-1]
    m = mask.reshape(-1, T).astype(jnp.float32)[:, :, None]
    sent = jnp.sum(token_embeddings * m, axis=1) / jnp.maximum(jnp.sum(m, axis=1), 1e-9)
    x = sent.reshape(B, S, -1)
    for lyr in raw["lstm"]:
        w_ih, w_hh = lyr["w_ih"], lyr["w_hh"]
        b = lyr["b_ih"] + lyr["b_hh"]
        H = w_hh.shape[1]

        def step(carry, x_t):
            h, c = carry
            g = (jnp.dot(x_t, w_ih.T, precision=hp)
                 + jnp.dot(h, w_hh.T, precision=hp) + b)
            i = jax.nn.sigmoid(g[:, :H])
            f = jax.nn.sigmoid(g[:, H:2 * H])
            gg = jnp.tanh(g[:, 2 * H:3 * H])
            o = jax.nn.sigmoid(g[:, 3 * H:])
            c = f * c + i * gg
            h = o * jnp.tanh(c)
            return (h, c), h

        init = (jnp.zeros((B, H), jnp.float32), jnp.zeros((B, H), jnp.float32))
        _, ys = lax.scan(step, init, jnp.transpose(x, (1, 0, 2)))
        x = jnp.transpose(ys, (1, 0, 2))
    h_last = x[:, -1, :]
    return jnp.dot(h_last, raw["w_out"].T, precision=hp) + raw["b_out"]


if __name__ == "__main__":
    # Small shapes consistent with the module's forward.
    batch = 2
    n_sentences = 4
    n_words_small = 8        # small stand-in for n_words = 70
    embed_dim = 32           # synthetic s_bert hidden size
    hidden_dim = 32
    n_layers = 2
    n_classes = 3

    key = jax.random.PRNGKey(0)
    k_emb, k_mask, k_par = jax.random.split(key, 3)

    # Synthetic s_bert last_hidden_state and attention mask.
    token_embeddings = jax.random.normal(
        k_emb, (batch * n_sentences, n_words_small, embed_dim), jnp.float32)
    mask = (jax.random.uniform(k_mask, (batch, n_sentences, n_words_small))
            > 0.3).astype(jnp.int32)

    raw = init_params_raw(k_par, n_layers, hidden_dim, embed_dim, n_classes)
    params = prepare_params(raw, n_classes)

    logits = classifier_forward(token_embeddings, mask, params)
    jax.block_until_ready(logits)
    assert logits.shape == (batch, n_classes)

    ref = reference_forward(token_embeddings, mask, raw, batch, n_sentences)
    # Tolerance covers bf16 embedding ingest + approx EUP reciprocal + default
    # MXU precision (reference uses f32 HIGHEST).
    assert jnp.allclose(logits, ref, atol=5e-3, rtol=5e-3), (logits, ref)
    print("KERNEL_OK")
</pallas_src>

<mosaic_0001>
module attributes {stable_mosaic.version = 11 : i64} {
  func.func @_pooling_kernel(%arg0: i32, %arg1: memref<16x8x32xbf16, #tpu.memory_space<vmem>>, %arg2: memref<16x8xf32, #tpu.memory_space<vmem>>, %arg3: memref<16x32xf32, #tpu.memory_space<vmem>>) attributes {dimension_semantics = [#tpu.dimension_semantics<parallel>], iteration_bounds = array<i64: 2>, scalar_prefetch = 0 : i64, scratch_operands = 0 : i64, tpu.core_type = #tpu.core_type<tc>, window_params = [{transform_indices = @transform_0, window_bounds = array<i64: 16, 8, 32>}, {transform_indices = @transform_1, window_bounds = array<i64: 16, 8>}, {transform_indices = @transform_2, window_bounds = array<i64: 16, 32>}]} {
    %c0 = arith.constant 0 : index
    %c0_0 = arith.constant 0 : index
    %c0_1 = arith.constant 0 : index
    %0 = vector.load %arg1[%c0, %c0_0, %c0_1] : memref<16x8x32xbf16, #tpu.memory_space<vmem>>, vector<16x8x32xbf16>
    %1 = arith.extf %0 : vector<16x8x32xbf16> to vector<16x8x32xf32>
    %c0_2 = arith.constant 0 : index
    %c0_3 = arith.constant 0 : index
    %2 = vector.load %arg2[%c0_2, %c0_3] : memref<16x8xf32, #tpu.memory_space<vmem>>, vector<16x8xf32>
    %3 = vector.shape_cast %2 : vector<16x8xf32> to vector<16x8x1xf32>
    %4 = vector.broadcast %3 : vector<16x8x1xf32> to vector<16x8x32xf32>
    %5 = arith.mulf %1, %4 : vector<16x8x32xf32>
    %cst = arith.constant dense<0.000000e+00> : vector<16x32xf32>
    %6 = vector.multi_reduction <add>, %5, %cst [1] : vector<16x8x32xf32> to vector<16x32xf32>
    %cst_4 = arith.constant dense<0.000000e+00> : vector<16xf32>
    %7 = vector.multi_reduction <add>, %2, %cst_4 [1] : vector<16x8xf32> to vector<16xf32>
    %8 = vector.shape_cast %7 : vector<16xf32> to vector<16x1xf32>
    %cst_5 = arith.constant 9.99999971E-10 : f32
    %9 = vector.broadcast %cst_5 : f32 to vector<16x1xf32>
    %10 = arith.maximumf %8, %9 : vector<16x1xf32>
    %11 = tpu.reciprocal %10 {approx = true} : vector<16x1xf32> -> vector<16x1xf32>
    %12 = vector.broadcast %11 : vector<16x1xf32> to vector<16x32xf32>
    %13 = arith.mulf %6, %12 : vector<16x32xf32>
    %c0_6 = arith.constant 0 : index
    %c0_7 = arith.constant 0 : index
    %14 = vector.load %arg3[%c0_6, %c0_7] : memref<16x32xf32, #tpu.memory_space<vmem>>, vector<16x32xf32>
    tpu.vector_store %arg3[%c0_6, %c0_7], %13 {strides = array<i32>} : memref<16x32xf32, #tpu.memory_space<vmem>>, vector<16x32xf32>,
    return
  }
  func.func @transform_0(%arg0: i32) -> (i32, i32, i32) {
    %c0_i32 = arith.constant 0 : i32
    %c0_i32_0 = arith.constant 0 : i32
    %c0_i32_1 = arith.constant 0 : i32
    return %arg0, %c0_i32, %c0_i32_0 : i32, i32, i32
  }
  func.func @transform_1(%arg0: i32) -> (i32, i32) {
    %c0_i32 = arith.constant 0 : i32
    %c0_i32_0 = arith.constant 0 : i32
    return %arg0, %c0_i32 : i32, i32
  }
  func.func @transform_2(%arg0: i32) -> (i32, i32) {
    %c0_i32 = arith.constant 0 : i32
    %c0_i32_0 = arith.constant 0 : i32
    return %arg0, %c0_i32 : i32, i32
  }
}

</mosaic_0001>

<llo_original>
// kernel: tpu_custom_call.1
$region0: #{tpu_custom_call.1}
  #allocation0 [shape = 'u32[]', space=smem, size = 0x4, offset = 0x4, fixed_abs, tag = 'smem constant byte address 0x4 - core index']
  #allocation1 [shape = 'u32[144,128]{1,0:T(1,128)}', space=vmem, size = 0x12000, scoped, tag = 'internal scratch']
  %s0 = inlined_call_operand.hbm [shape: bf16[32,8,32], index: 0, kind: input, shape index: {}]
  %s1 = inlined_call_operand.vmem [shape: f32[32,8], index: 1, kind: input, shape index: {}]
  %s2 = inlined_call_operand.hbm [shape: f32[32,32], index: 2, kind: output, shape index: {}]
  %s3 = sld [smem:[#allocation0]]
  $region45: #{tpu_custom_call.1} parent=0
    _
  %s5 = ssub.s32 1, %s3
  %s6 = scalar_select 0, %s5, %s3
  $region1: #{tpu_custom_call.1} parent=0
    #allocation2 [shape = 'u8[65536]{0}', space=vmem, size = 0x10000, scoped, tag = 'input window, operand 0']
    #allocation3 [shape = 's32[2]{0}', space=sflag, size = 0x8, scoped, tag = 'scoped memory for tpu_custom_call.1']
    #allocation4 [shape = 's32[2]{0}', space=sflag, size = 0x8, scoped, tag = 'scoped memory for tpu_custom_call.1']
    #allocation5 [shape = 'u8[16384]{0}', space=vmem, size = 0x4000, scoped, tag = 'output window, operand 0']
    %7 = vsyncpa [#allocation3], 0
    %s8 = scalar_lea.sflag [#allocation3], 1
    %9 = vsyncpa %s8, 0
    %10 = vsyncpa [#allocation4], 0
    %s11 = scalar_lea.sflag [#allocation4], 1
    %12 = vsyncpa %s11, 0
    loop: start=0, step=1, limit=4
    $region2: #{tpu_custom_call.1} parent=1 // loop_pre_header
      _
    $region3: #{tpu_custom_call.1} parent=1 // loop_header
      %s14 = sphi 0, %s18
      %p15 = scmp.ge.s32.totalorder %s14, 4
      %s24 = sphi 0, %s26
      %s27 = sphi 0, %s24
      %s28 = sphi 0, %s27
      %s44 = sphi 0, %s28
      %s50 = sphi 0, %s52
      %s53 = sphi 0, %s50
      %s54 = sphi 0, %s53
      %s70 = sphi 0, %s54
      %s76 = sphi 0, %s78
      %s79 = sphi 0, %s76
      %s80 = sphi 0, %s79
      %s96 = sphi 0, %s80
    $region4: #{tpu_custom_call.1} parent=1 // loop_header_branch
      %17 = sbr.rel (%p15) target = $region8
    $region5: #{tpu_custom_call.1} parent=1 // loop_body
      %s19 = ssub.s32 %s14, 1
      %s20 = ssub.s32 %s14, 2
      %s21 = sadd.s32 %s14, 1
      %s22 = ssub.s32 %s14, %s21
      %p23 = scmp.eq.s32.totalorder %s22, 0
      %s25 = sadd.s32 %s24, 1
      %s26 = scalar_select %p23, %s24, %s25
      %p29 = pneg %p23
      %p30 = scmp.eq.s32.totalorder %s14, 1
      %p31 = por %p29, %p30
      %p32 = scmp.ne.s32.totalorder %s24, %s27
      %p33 = scmp.eq.s32.totalorder %s14, 0
      %p34 = por %p32, %p33
      %p35 = scmp.ne.s32.totalorder %s24, %s27
      %p36 = scmp.eq.s32.totalorder %s19, 1
      %p37 = por %p35, %p36
      %p38 = scmp.ne.s32.totalorder %s27, %s28
      %p39 = scmp.eq.s32.totalorder %s19, 0
      %p40 = por %p38, %p39
      %p41 = scmp.ne.s32.totalorder %s27, %s28
      %p42 = scmp.eq.s32.totalorder %s20, 1
      %p43 = por %p41, %p42
      %p45 = scmp.ne.s32.totalorder %s28, %s44
      %p46 = scmp.eq.s32.totalorder %s20, 0
      %p47 = por %p45, %p46
      %s48 = ssub.s32 %s14, %s21
      %p49 = scmp.eq.s32.totalorder %s48, 0
      %s51 = sadd.s32 %s50, 1
      %s52 = scalar_select %p49, %s50, %s51
      %p55 = pneg %p49
      %p56 = scmp.eq.s32.totalorder %s14, 1
      %p57 = por %p55, %p56
      %p58 = scmp.ne.s32.totalorder %s50, %s53
      %p59 = scmp.eq.s32.totalorder %s14, 0
      %p60 = por %p58, %p59
      %p61 = scmp.ne.s32.totalorder %s50, %s53
      %p62 = scmp.eq.s32.totalorder %s19, 1
      %p63 = por %p61, %p62
      %p64 = scmp.ne.s32.totalorder %s53, %s54
      %p65 = scmp.eq.s32.totalorder %s19, 0
      %p66 = por %p64, %p65
      %p67 = scmp.ne.s32.totalorder %s53, %s54
      %p68 = scmp.eq.s32.totalorder %s20, 1
      %p69 = por %p67, %p68
      %p71 = scmp.ne.s32.totalorder %s54, %s70
      %p72 = scmp.eq.s32.totalorder %s20, 0
      %p73 = por %p71, %p72
      %s74 = ssub.s32 %s14, %s21
      %p75 = scmp.eq.s32.totalorder %s74, 0
      %s77 = sadd.s32 %s76, 1
      %s78 = scalar_select %p75, %s76, %s77
      %p81 = pneg %p75
      %p82 = scmp.eq.s32.totalorder %s14, 1
      %p83 = por %p81, %p82
      %p84 = scmp.ne.s32.totalorder %s76, %s79
      %p85 = scmp.eq.s32.totalorder %s14, 0
      %p86 = por %p84, %p85
      %p87 = scmp.ne.s32.totalorder %s76, %s79
      %p88 = scmp.eq.s32.totalorder %s19, 1
      %p89 = por %p87, %p88
      %p90 = scmp.ne.s32.totalorder %s79, %s80
      %p91 = scmp.eq.s32.totalorder %s19, 0
      %p92 = por %p90, %p91
      %p93 = scmp.ne.s32.totalorder %s79, %s80
      %p94 = scmp.eq.s32.totalorder %s20, 1
      %p95 = por %p93, %p94
      %p97 = scmp.ne.s32.totalorder %s80, %s96
      %p98 = scmp.eq.s32.totalorder %s20, 0
      %p99 = por %p97, %p98
      %p100 = scmp.le.s32.totalorder 1, %s14
      %p101 = scmp.lt.s32.totalorder %s14, 3
      %p102 = pnand %p100, %p101
      %p103 = pneg %p102
      // Predicated region
      $region9: #{tpu_custom_call.1} parent=5 // pred_check
        _
      $region10: #{tpu_custom_call.1} parent=5 // pred_check_branch
        %105 = sbr.rel (%p102) target = $region12
      $region11: #{tpu_custom_call.1} parent=5 // pred_region
        %s106 = ssub.s32 %s14, 1
      $region12: #{tpu_custom_call.1} parent=5 // pred_fallthru
        _
      %p107 = scmp.lt.s32.totalorder %s14, 2
      // Predicated region
      $region13: #{tpu_custom_call.1} parent=5 // pred_check
        %p108 = pneg %p107
      $region14: #{tpu_custom_call.1} parent=5 // pred_check_branch
        %110 = sbr.rel (%p108) target = $region16
      $region15: #{tpu_custom_call.1} parent=5 // pred_region
        // Predicated region
        $region17: #{tpu_custom_call.1} parent=15 // pred_check
          %p111 = pneg %p34
        $region18: #{tpu_custom_call.1} parent=15 // pred_check_branch
          %113 = sbr.rel (%p111) target = $region20
        $region19: #{tpu_custom_call.1} parent=15 // pred_region
          %s114 = sand.u32 %s24, 1
          %s115 = scalar_lea.sflag [#allocation3], %s114
          %s116 = sand.u32 %s24, 1
          %s117 = smul.addr %s116, 64
          %s118 = scalar_lea.vmem [#allocation2], %s117
          %s119 = smul.u32 16, %s14
          %s121 = ssub.s32 1024, 1024
          %122 = vsyncadd %s115, %s121
          %s123 = smul.addr %s119, 64
          %s124 = scalar_lea.hbm %s0, %s123
          %s125 = sshll.u32 %s118, 4
          %s126 = int_to_ptr.vmem [resolvable:$true] %s125
          %131 = dma.hbm_to_vmem [thread:$0]  %s124, 1024, %s126, %s115, 64, 64, 4
        $region20: #{tpu_custom_call.1} parent=15 // pred_fallthru
          _
        // Predicated region
        $region21: #{tpu_custom_call.1} parent=15 // pred_check
          %p132 = pneg %p60
        $region22: #{tpu_custom_call.1} parent=15 // pred_check_branch
          %134 = sbr.rel (%p132) target = $region24
        $region23: #{tpu_custom_call.1} parent=15 // pred_region
          %s135 = smul.u32 2, %s14
          %p136 = scmp.lt.s32.totalorder %s135, 3
          %s137 = scalar_select %p136, %s135, 3
          %s138 = smul.addr %s137, 8
          %s139 = scalar_lea.vmem %s1, %s138
          %s140 = smul.u32 2, %s14
        $region24: #{tpu_custom_call.1} parent=15 // pred_fallthru
          _
      $region16: #{tpu_custom_call.1} parent=5 // pred_fallthru
        _
      %p141 = scmp.le.s32.totalorder 1, %s14
      %p142 = scmp.lt.s32.totalorder %s14, 3
      %p143 = pnand %p141, %p142
      %p144 = pneg %p143
      // Predicated region
      $region25: #{tpu_custom_call.1} parent=5 // pred_check
        _
      $region26: #{tpu_custom_call.1} parent=5 // pred_check_branch
        %146 = sbr.rel (%p143) target = $region28
      $region27: #{tpu_custom_call.1} parent=5 // pred_region
        %s147 = ssub.s32 %s14, 1
        %s148 = sand.u32 %s27, 1
        %s149 = scalar_lea.sflag [#allocation3], %s148
        %s150 = sand.u32 %s27, 1
        %s151 = smul.addr %s150, 64
        %s152 = scalar_lea.vmem [#allocation2], %s151
        // Predicated region
        $region29: #{tpu_custom_call.1} parent=27 // pred_check
          %p153 = pneg %p40
        $region30: #{tpu_custom_call.1} parent=27 // pred_check_branch
          %155 = sbr.rel (%p153) target = $region32
        $region31: #{tpu_custom_call.1} parent=27 // pred_region
          %156 = dma.done %s149, 1024
        $region32: #{tpu_custom_call.1} parent=27 // pred_fallthru
          _
        %s157 = sand.u32 %s27, 1
        %s158 = scalar_lea.sflag [#allocation3], %s157
        %s159 = sand.u32 %s27, 1
        %s160 = smul.addr %s159, 64
        %s161 = scalar_lea.vmem [#allocation2], %s160
        %p162 = pneg %p40
        %p163 = pneg %p37
        %s164 = smul.u32 2, %s19
        %p165 = scmp.lt.s32.totalorder %s164, 3
        %s166 = scalar_select %p165, %s164, 3
        %s167 = smul.addr %s166, 8
        %s168 = scalar_lea.vmem %s1, %s167
        %p169 = pneg %p66
        %p170 = pneg %p63
        %p171 = pneg %p92
        %p172 = pneg %p89
        %s173 = sand.u32 %s79, 1
        %s174 = scalar_lea.sflag [#allocation4], %s173
        %s175 = sand.u32 %s79, 1
        %s176 = smul.addr %s175, 16
        %s177 = scalar_lea.vmem [#allocation5], %s176
        %s178 = smul.u32 16, %s19
        %s179 = smul.u32 2, %s19
        %p180 = scmp.lt.s32.totalorder %s179, 3
        %s181 = scalar_select %p180, %s179, 3
        %s182 = smul.addr %s181, 8
        %s183 = scalar_lea.vmem %s1, %s182
        %s184 = smul.u32 2, %s19
        %s185 = smul.u32 2, %s19
        %v186 = vld [vmem:[%s152] sm:$0xf]
        %v187 = vld [vmem:[%s152 + $0x4] sm:$0xf]
        %v188 = vld [vmem:[%s152 + $0x8] sm:$0xf]
        %v189 = vld [vmem:[%s152 + $0xc] sm:$0xf]
        %v190 = vld [vmem:[%s152 + $0x10] sm:$0xf]
        %v191 = vld [vmem:[%s152 + $0x14] sm:$0xf]
        %v192 = vld [vmem:[%s152 + $0x18] sm:$0xf]
        %v193 = vld [vmem:[%s152 + $0x1c] sm:$0xf]
        %v194 = vld [vmem:[%s152 + $0x20] sm:$0xf]
        %v195 = vld [vmem:[%s152 + $0x24] sm:$0xf]
        %v196 = vld [vmem:[%s152 + $0x28] sm:$0xf]
        %v197 = vld [vmem:[%s152 + $0x2c] sm:$0xf]
        %v198 = vld [vmem:[%s152 + $0x30] sm:$0xf]
        %v199 = vld [vmem:[%s152 + $0x34] sm:$0xf]
        %v200 = vld [vmem:[%s152 + $0x38] sm:$0xf]
        %v201 = vld [vmem:[%s152 + $0x3c] sm:$0xf]
        %v202 = vunpack.c.l.bf16 %v186
        %v203 = vunpack.c.l.bf16 %v187
        %v204 = vunpack.c.l.bf16 %v188
        %v205 = vunpack.c.l.bf16 %v189
        %v206 = vunpack.c.l.bf16 %v190
        %v207 = vunpack.c.l.bf16 %v191
        %v208 = vunpack.c.l.bf16 %v192
        %v209 = vunpack.c.l.bf16 %v193
        %v210 = vunpack.c.l.bf16 %v194
        %v211 = vunpack.c.l.bf16 %v195
        %v212 = vunpack.c.l.bf16 %v196
        %v213 = vunpack.c.l.bf16 %v197
        %v214 = vunpack.c.l.bf16 %v198
        %v215 = vunpack.c.l.bf16 %v199
        %v216 = vunpack.c.l.bf16 %v200
        %v217 = vunpack.c.l.bf16 %v201
        %v218 = vld [vmem:[%s183] sm:$0xff]
        %v219 = vld [vmem:[%s183 + $0x8] sm:$0xff]
        %v220 = vlaneseq
        %v221 = vshrl.u32 %v220, 7
        %v222 = vsub.s32 0, %v221
        %v223 = vrot.slane %v218, %v222
        %225 = vbcast.lane.b32.xlu0 %v223, 256
        %v226 = vpop.permute.xlu0 %225
        %v227 = vlaneseq
        %v228 = vshrl.u32 %v227, 7
        %v229 = vsub.s32 1, %v228
        %v230 = vrot.slane %v218, %v229
        %232 = vbcast.lane.b32.xlu0 %v230, 256
        %v233 = vpop.permute.xlu0 %232
        %v234 = vlaneseq
        %v235 = vshrl.u32 %v234, 7
        %v236 = vsub.s32 2, %v235
        %v237 = vrot.slane %v218, %v236
        %239 = vbcast.lane.b32.xlu0 %v237, 256
        %v240 = vpop.permute.xlu0 %239
        %v241 = vlaneseq
        %v242 = vshrl.u32 %v241, 7
        %v243 = vsub.s32 3, %v242
        %v244 = vrot.slane %v218, %v243
        %246 = vbcast.lane.b32.xlu0 %v244, 256
        %v247 = vpop.permute.xlu0 %246
        %v248 = vlaneseq
        %v249 = vshrl.u32 %v248, 7
        %v250 = vsub.s32 4, %v249
        %v251 = vrot.slane %v218, %v250
        %253 = vbcast.lane.b32.xlu0 %v251, 256
        %v254 = vpop.permute.xlu0 %253
        %v255 = vlaneseq
        %v256 = vshrl.u32 %v255, 7
        %v257 = vsub.s32 5, %v256
        %v258 = vrot.slane %v218, %v257
        %260 = vbcast.lane.b32.xlu0 %v258, 256
        %v261 = vpop.permute.xlu0 %260
        %v262 = vlaneseq
        %v263 = vshrl.u32 %v262, 7
        %v264 = vsub.s32 6, %v263
        %v265 = vrot.slane %v218, %v264
        %267 = vbcast.lane.b32.xlu0 %v265, 256
        %v268 = vpop.permute.xlu0 %267
        %v269 = vlaneseq
        %v270 = vshrl.u32 %v269, 7
        %v271 = vsub.s32 7, %v270
        %v272 = vrot.slane %v218, %v271
        %274 = vbcast.lane.b32.xlu0 %v272, 256
        %v275 = vpop.permute.xlu0 %274
        %v276 = vlaneseq
        %v277 = vshrl.u32 %v276, 7
        %v278 = vsub.s32 0, %v277
        %v279 = vrot.slane %v219, %v278
        %281 = vbcast.lane.b32.xlu0 %v279, 256
        %v282 = vpop.permute.xlu0 %281
        %v283 = vlaneseq
        %v284 = vshrl.u32 %v283, 7
        %v285 = vsub.s32 1, %v284
        %v286 = vrot.slane %v219, %v285
        %288 = vbcast.lane.b32.xlu0 %v286, 256
        %v289 = vpop.permute.xlu0 %288
        %v290 = vlaneseq
        %v291 = vshrl.u32 %v290, 7
        %v292 = vsub.s32 2, %v291
        %v293 = vrot.slane %v219, %v292
        %295 = vbcast.lane.b32.xlu0 %v293, 256
        %v296 = vpop.permute.xlu0 %295
        %v297 = vlaneseq
        %v298 = vshrl.u32 %v297, 7
        %v299 = vsub.s32 3, %v298
        %v300 = vrot.slane %v219, %v299
        %302 = vbcast.lane.b32.xlu0 %v300, 256
        %v303 = vpop.permute.xlu0 %302
        %v304 = vlaneseq
        %v305 = vshrl.u32 %v304, 7
        %v306 = vsub.s32 4, %v305
        %v307 = vrot.slane %v219, %v306
        %309 = vbcast.lane.b32.xlu0 %v307, 256
        %v310 = vpop.permute.xlu0 %309
        %v311 = vlaneseq
        %v312 = vshrl.u32 %v311, 7
        %v313 = vsub.s32 5, %v312
        %v314 = vrot.slane %v219, %v313
        %316 = vbcast.lane.b32.xlu0 %v314, 256
        %v317 = vpop.permute.xlu0 %316
        %v318 = vlaneseq
        %v319 = vshrl.u32 %v318, 7
        %v320 = vsub.s32 6, %v319
        %v321 = vrot.slane %v219, %v320
        %323 = vbcast.lane.b32.xlu0 %v321, 256
        %v324 = vpop.permute.xlu0 %323
        %v325 = vlaneseq
        %v326 = vshrl.u32 %v325, 7
        %v327 = vsub.s32 7, %v326
        %v328 = vrot.slane %v219, %v327
        %330 = vbcast.lane.b32.xlu0 %v328, 256
        %v331 = vpop.permute.xlu0 %330
        %v332 = vmul.f32 %v202, %v226
        %v333 = vmul.f32 %v203, %v233
        %v334 = vmul.f32 %v204, %v240
        %v335 = vmul.f32 %v205, %v247
        %v336 = vmul.f32 %v206, %v254
        %v337 = vmul.f32 %v207, %v261
        %v338 = vmul.f32 %v208, %v268
        %v339 = vmul.f32 %v209, %v275
        %v340 = vmul.f32 %v210, %v282
        %v341 = vmul.f32 %v211, %v289
        %v342 = vmul.f32 %v212, %v296
        %v343 = vmul.f32 %v213, %v303
        %v344 = vmul.f32 %v214, %v310
        %v345 = vmul.f32 %v215, %v317
        %v346 = vmul.f32 %v216, %v324
        %v347 = vmul.f32 %v217, %v331
        %vm348 = vcmask 261120
        %v349 = vsel %vm348, %v332, 0.0
        %v350 = vrot.slane %v349, 4
        %v351 = vadd.f32 %v349, %v350
        %v352 = vrot.slane %v351, 2
        %v353 = vadd.f32 %v351, %v352
        %v354 = vrot.slane %v353, 1
        %v355 = vadd.f32 %v353, %v354
        %v356 = vsel %vm348, %v333, 0.0
        %v357 = vrot.slane %v356, 4
        %v358 = vadd.f32 %v356, %v357
        %v359 = vrot.slane %v358, 2
        %v360 = vadd.f32 %v358, %v359
        %v361 = vrot.slane %v360, 1
        %v362 = vadd.f32 %v360, %v361
        %v363 = vsel %vm348, %v334, 0.0
        %v364 = vrot.slane %v363, 4
        %v365 = vadd.f32 %v363, %v364
        %v366 = vrot.slane %v365, 2
        %v367 = vadd.f32 %v365, %v366
        %v368 = vrot.slane %v367, 1
        %v369 = vadd.f32 %v367, %v368
        %v370 = vsel %vm348, %v335, 0.0
        %v371 = vrot.slane %v370, 4
        %v372 = vadd.f32 %v370, %v371
        %v373 = vrot.slane %v372, 2
        %v374 = vadd.f32 %v372, %v373
        %v375 = vrot.slane %v374, 1
        %v376 = vadd.f32 %v374, %v375
        %v377 = vsel %vm348, %v336, 0.0
        %v378 = vrot.slane %v377, 4
        %v379 = vadd.f32 %v377, %v378
        %v380 = vrot.slane %v379, 2
        %v381 = vadd.f32 %v379, %v380
        %v382 = vrot.slane %v381, 1
        %v383 = vadd.f32 %v381, %v382
        %v384 = vsel %vm348, %v337, 0.0
        %v385 = vrot.slane %v384, 4
        %v386 = vadd.f32 %v384, %v385
        %v387 = vrot.slane %v386, 2
        %v388 = vadd.f32 %v386, %v387
        %v389 = vrot.slane %v388, 1
        %v390 = vadd.f32 %v388, %v389
        %v391 = vsel %vm348, %v338, 0.0
        %v392 = vrot.slane %v391, 4
        %v393 = vadd.f32 %v391, %v392
        %v394 = vrot.slane %v393, 2
        %v395 = vadd.f32 %v393, %v394
        %v396 = vrot.slane %v395, 1
        %v397 = vadd.f32 %v395, %v396
        %v398 = vsel %vm348, %v339, 0.0
        %v399 = vrot.slane %v398, 4
        %v400 = vadd.f32 %v398, %v399
        %v401 = vrot.slane %v400, 2
        %v402 = vadd.f32 %v400, %v401
        %v403 = vrot.slane %v402, 1
        %v404 = vadd.f32 %v402, %v403
        %v405 = vsel %vm348, %v340, 0.0
        %v406 = vrot.slane %v405, 4
        %v407 = vadd.f32 %v405, %v406
        %v408 = vrot.slane %v407, 2
        %v409 = vadd.f32 %v407, %v408
        %v410 = vrot.slane %v409, 1
        %v411 = vadd.f32 %v409, %v410
        %v412 = vsel %vm348, %v341, 0.0
        %v413 = vrot.slane %v412, 4
        %v414 = vadd.f32 %v412, %v413
        %v415 = vrot.slane %v414, 2
        %v416 = vadd.f32 %v414, %v415
        %v417 = vrot.slane %v416, 1
        %v418 = vadd.f32 %v416, %v417
        %v419 = vsel %vm348, %v342, 0.0
        %v420 = vrot.slane %v419, 4
        %v421 = vadd.f32 %v419, %v420
        %v422 = vrot.slane %v421, 2
        %v423 = vadd.f32 %v421, %v422
        %v424 = vrot.slane %v423, 1
        %v425 = vadd.f32 %v423, %v424
        %v426 = vsel %vm348, %v343, 0.0
        %v427 = vrot.slane %v426, 4
        %v428 = vadd.f32 %v426, %v427
        %v429 = vrot.slane %v428, 2
        %v430 = vadd.f32 %v428, %v429
        %v431 = vrot.slane %v430, 1
        %v432 = vadd.f32 %v430, %v431
        %v433 = vsel %vm348, %v344, 0.0
        %v434 = vrot.slane %v433, 4
        %v435 = vadd.f32 %v433, %v434
        %v436 = vrot.slane %v435, 2
        %v437 = vadd.f32 %v435, %v436
        %v438 = vrot.slane %v437, 1
        %v439 = vadd.f32 %v437, %v438
        %v440 = vsel %vm348, %v345, 0.0
        %v441 = vrot.slane %v440, 4
        %v442 = vadd.f32 %v440, %v441
        %v443 = vrot.slane %v442, 2
        %v444 = vadd.f32 %v442, %v443
        %v445 = vrot.slane %v444, 1
        %v446 = vadd.f32 %v444, %v445
        %v447 = vsel %vm348, %v346, 0.0
        %v448 = vrot.slane %v447, 4
        %v449 = vadd.f32 %v447, %v448
        %v450 = vrot.slane %v449, 2
        %v451 = vadd.f32 %v449, %v450
        %v452 = vrot.slane %v451, 1
        %v453 = vadd.f32 %v451, %v452
        %v454 = vsel %vm348, %v347, 0.0
        %v455 = vrot.slane %v454, 4
        %v456 = vadd.f32 %v454, %v455
        %v457 = vrot.slane %v456, 2
        %v458 = vadd.f32 %v456, %v457
        %v459 = vrot.slane %v458, 1
        %v460 = vadd.f32 %v458, %v459
        %vm461 = vcmask 64512
        %v462 = vsel %vm461, %v218, 0.0
        %463 = vadd.xlane.f32.xlu0 %v462
        %v464 = vpop.xlane.xlu0 %463
        %v465 = vsel %vm461, %v219, 0.0
        %466 = vadd.xlane.f32.xlu0 %v465
        %v467 = vpop.xlane.xlu0 %466
        %v468 = vmax.f32 %v464, 1e-09
        %v469 = vmax.f32 %v467, 1e-09
        %v470 = vrcp.pop %v468
        %v471 = vrcp.pop %v469
        %v474 = vrot.slane %v470, 1
        %v475 = vrot.slane %v470, 2
        %v476 = vrot.slane %v470, 3
        %v477 = vrot.slane %v470, 4
        %v478 = vrot.slane %v470, 5
        %v479 = vrot.slane %v470, 6
        %v480 = vrot.slane %v470, 7
        %v481 = vrot.slane %v471, 1
        %v482 = vrot.slane %v471, 2
        %v483 = vrot.slane %v471, 3
        %v484 = vrot.slane %v471, 4
        %v485 = vrot.slane %v471, 5
        %v486 = vrot.slane %v471, 6
        %v487 = vrot.slane %v471, 7
        %v504 = vmul.f32 %v355, %v470
        %v505 = vmul.f32 %v362, %v474
        %v506 = vmul.f32 %v369, %v475
        %v507 = vmul.f32 %v376, %v476
        %v508 = vmul.f32 %v383, %v477
        %v509 = vmul.f32 %v390, %v478
        %v510 = vmul.f32 %v397, %v479
        %v511 = vmul.f32 %v404, %v480
        %v512 = vmul.f32 %v411, %v471
        %v513 = vmul.f32 %v418, %v481
        %v514 = vmul.f32 %v425, %v482
        %v515 = vmul.f32 %v432, %v483
        %v516 = vmul.f32 %v439, %v484
        %v517 = vmul.f32 %v446, %v485
        %v518 = vmul.f32 %v453, %v486
        %v519 = vmul.f32 %v460, %v487
        %v536 = vrot.slane %v505, 7
        %vm537 = vcmask 1041409
        %v538 = vsel %vm537, %v536, %v504
        %v539 = vrot.slane %v506, 6
        %vm540 = vcmask 1042434
        %v541 = vsel %vm540, %v539, %v538
        %v542 = vrot.slane %v507, 5
        %vm543 = vcmask 1043459
        %v544 = vsel %vm543, %v542, %v541
        %v545 = vrot.slane %v508, 4
        %vm546 = vcmask 1044484
        %v547 = vsel %vm546, %v545, %v544
        %v548 = vrot.slane %v509, 3
        %vm549 = vcmask 1045509
        %v550 = vsel %vm549, %v548, %v547
        %v551 = vrot.slane %v510, 2
        %vm552 = vcmask 1046534
        %v553 = vsel %vm552, %v551, %v550
        %v554 = vrot.slane %v511, 1
        %vm555 = vcmask 1047559
        %v556 = vsel %vm555, %v554, %v553
        %v557 = vrot.slane %v513, 7
        %v558 = vsel %vm537, %v557, %v512
        %v559 = vrot.slane %v514, 6
        %v560 = vsel %vm540, %v559, %v558
        %v561 = vrot.slane %v515, 5
        %v562 = vsel %vm543, %v561, %v560
        %v563 = vrot.slane %v516, 4
        %v564 = vsel %vm546, %v563, %v562
        %v565 = vrot.slane %v517, 3
        %v566 = vsel %vm549, %v565, %v564
        %v567 = vrot.slane %v518, 2
        %v568 = vsel %vm552, %v567, %v566
        %v569 = vrot.slane %v519, 1
        %v570 = vsel %vm555, %v569, %v568
        %573 = vst.msk [vmem:[%s177] sm:$0xff] %vm348, %v556
        %574 = vst.msk [vmem:[%s177 + $0x8] sm:$0xff] %vm348, %v570
        %s575 = sand.u32 %s79, 1
        %s576 = scalar_lea.sflag [#allocation4], %s575
        %s577 = sand.u32 %s79, 1
        %s578 = smul.addr %s577, 16
        %s579 = scalar_lea.vmem [#allocation5], %s578
        // Predicated region
        $region33: #{tpu_custom_call.1} parent=27 // pred_check
          %p580 = pneg %p89
        $region34: #{tpu_custom_call.1} parent=27 // pred_check_branch
          %582 = sbr.rel (%p580) target = $region36
        $region35: #{tpu_custom_call.1} parent=27 // pred_region
          %s583 = smul.u32 2, %s19
          %s585 = ssub.s32 256, 256
          %586 = vsyncadd %s576, %s585
          %s587 = smul.addr %s583, 128
          %s588 = scalar_lea.hbm %s2, %s587
          %s589 = sshll.u32 %s579, 4
          %s590 = int_to_ptr.vmem [resolvable:$true] %s589
          %595 = dma.vmem_to_hbm [thread:$0]  %s590, 256, %s588, %s576, 128, 128, 8
        $region36: #{tpu_custom_call.1} parent=27 // pred_fallthru
          _
      $region28: #{tpu_custom_call.1} parent=5 // pred_fallthru
        _
      %p596 = scmp.le.s32.totalorder 2, %s14
      // Predicated region
      $region37: #{tpu_custom_call.1} parent=5 // pred_check
        %p597 = pneg %p596
      $region38: #{tpu_custom_call.1} parent=5 // pred_check_branch
        %599 = sbr.rel (%p597) target = $region40
      $region39: #{tpu_custom_call.1} parent=5 // pred_region
        %s600 = ssub.s32 %s14, 2
        // Predicated region
        $region41: #{tpu_custom_call.1} parent=39 // pred_check
          %p601 = pneg %p95
        $region42: #{tpu_custom_call.1} parent=39 // pred_check_branch
          %603 = sbr.rel (%p601) target = $region44
        $region43: #{tpu_custom_call.1} parent=39 // pred_region
          %s604 = sand.u32 %s80, 1
          %s605 = scalar_lea.sflag [#allocation4], %s604
          %s606 = sand.u32 %s80, 1
          %s607 = smul.addr %s606, 16
          %s608 = scalar_lea.vmem [#allocation5], %s607
          %609 = dma.done %s605, 256
        $region44: #{tpu_custom_call.1} parent=39 // pred_fallthru
          _
      $region40: #{tpu_custom_call.1} parent=5 // pred_fallthru
        _
    $region6: #{tpu_custom_call.1} parent=1 // loop_footer
      %s18 = sadd.s32 1, %s14
    $region7: #{tpu_custom_call.1} parent=1 // loop_footer_branch
      %13 = sbr.rel target = $region3
    $region8: #{tpu_custom_call.1} parent=1 // loop_exit
      _
    %610 = vsyncpa [#allocation3], 1
    %s611 = scalar_lea.sflag [#allocation3], 1
    %612 = vsyncpa %s611, 1
    %613 = vsyncpa [#allocation4], 1
    %s614 = scalar_lea.sflag [#allocation4], 1
    %615 = vsyncpa %s614, 1

</llo_original>
